<compile_context>
chip_gen: v6e
topology: v6e:2x2x1
jax: 0.10.0
libtpu: 0.0.40
codegen_flags: <defaults>
</compile_context>

<pallas_src>
import functools
import numpy as np

import jax
import jax.numpy as jnp
from jax.experimental import pallas as pl
from jax.experimental.pallas import tpu as pltpu

# ----------------------------- config ---------------------------------------
D_VOCAB = 16
D_MODEL = 32
BATCH   = 2
SEQ     = 8

_SUBLANE    = 8
_LANE       = 128
_MAX_TILE_M = 512     # rows per block   (sized for v7x's 64 MiB VMEM)
_MAX_TILE_N = 1024    # vocab lanes per block (shared with prepare_*)


def _round_up(x, m):
    return -(-x // m) * m


def _cdiv(a, b):
    return -(-a // b)


# ----------------------------- kernel ---------------------------------------
def unembed_kernel(x_ref, wu_ref, out_ref):
    # x_ref:  (tile_m, D)       bf16 residual-stream rows (batch*pos fused)
    # wu_ref: (D, tile_n)       bf16 unembedding tile (vocab lane-padded)
    # out_ref:(tile_m, tile_n)  f32 logits, lane-dense unmasked stores
    out_ref[...] = jnp.dot(x_ref[...], wu_ref[...],
                           preferred_element_type=jnp.float32)


# ----------------------------- weight prep (once, not per call) -------------
def prepare_unembed_params(w_u, compute_dtype=jnp.bfloat16):
    """Pad d_vocab to a lane/tile multiple and cast to the streaming dtype.

    This is done ONCE at init time; doing it inside the jitted forward would
    be a full HBM->HBM copy of the weight matrix on every call.
    Returns (prepped_weights, original_d_vocab).
    """
    _, V = w_u.shape
    V_pad = _round_up(V, _LANE)
    if V_pad > _MAX_TILE_N:
        V_pad = _round_up(V, _MAX_TILE_N)     # keep vocab tiles evenly divisible
    if V_pad != V:
        w_u = jnp.pad(w_u, ((0, 0), (0, V_pad - V)))
    return w_u.astype(compute_dtype), V


# ----------------------------- forward ---------------------------------------
@functools.partial(jax.jit, static_argnames=("d_vocab",))
def unembed_forward(x, w_u_prepped, *, d_vocab):
    """x: (..., d_model);  w_u_prepped: (d_model, V_pad) from prepare_unembed_params."""
    *lead, D = x.shape
    Dw, V_pad = w_u_prepped.shape
    assert D == Dw, "d_model mismatch between x and W_U"
    compute_dtype = w_u_prepped.dtype
    compute_bytes = jnp.dtype(compute_dtype).itemsize

    M = int(np.prod(lead)) if lead else 1
    x_flat = x.reshape(M, D).astype(compute_dtype)

    # ---- row tiling: waste < one sublane tile, no blanket round-up ----------
    grid_m = _cdiv(M, _MAX_TILE_M)
    tile_m = _round_up(_cdiv(M, grid_m), _SUBLANE)

    # ---- vocab tiling: weight & output streamed in lane-dense tiles ---------
    tile_n = min(V_pad, _MAX_TILE_N)
    grid_n = V_pad // tile_n                      # exact by construction

    # ---- v7x megacore: guarantee >= 2 grid steps on a parallel axis ---------
    if grid_m * grid_n == 1 and tile_m >= 2 * _SUBLANE:
        tile_m = _round_up(_cdiv(tile_m, 2), _SUBLANE)
        grid_m = 2

    M_pad = grid_m * tile_m
    if M_pad != M:
        x_flat = jnp.pad(x_flat, ((0, M_pad - M), (0, 0)))

    # ---- VMEM budget (double-buffered blocks), sized for the smallest gen ---
    footprint = (2 * (tile_m * D + D * tile_n) * compute_bytes
                 + 2 * tile_m * tile_n * 4)
    vmem_limit = int(min(max(32 << 20, 2 * footprint), 56 << 20))

    # Grid = (vocab, rows): the weight block index ignores the inner row index,
    # so Pallas skips its re-DMA across the row sweep -> W_U streamed once.
    out = pl.pallas_call(
        unembed_kernel,
        out_shape=jax.ShapeDtypeStruct((M_pad, V_pad), jnp.float32),
        grid_spec=pltpu.PrefetchScalarGridSpec(
            num_scalar_prefetch=0,
            grid=(grid_n, grid_m),
            in_specs=[
                pl.BlockSpec((tile_m, D), lambda n, m: (m, 0)),   # activations
                pl.BlockSpec((D, tile_n), lambda n, m: (0, n)),   # weight stream
            ],
            out_specs=pl.BlockSpec((tile_m, tile_n), lambda n, m: (m, n)),
        ),
        compiler_params=pltpu.CompilerParams(
            dimension_semantics=("parallel", "parallel"),
            vmem_limit_bytes=vmem_limit),
    )(x_flat, w_u_prepped)

    return out[:M, :d_vocab].reshape(*lead, d_vocab)


# ----------------------------- params / reference -----------------------------
def init_params(key):
    # Matches the PyTorch module: W_U = randn(d_model, d_vocab) / sqrt(d_vocab)
    w_u = jax.random.normal(key, (D_MODEL, D_VOCAB), dtype=jnp.float32)
    return w_u / np.sqrt(D_VOCAB)


# ----------------------------- main -------------------------------------------
if __name__ == "__main__":
    key = jax.random.PRNGKey(0)
    k_w, k_x = jax.random.split(key)

    w_u = init_params(k_w)
    # x is the residual stream entering the unembed: (batch, pos, d_model)
    x = jax.random.normal(k_x, (BATCH, SEQ, D_MODEL), dtype=jnp.float32)

    w_u_prepped, d_vocab = prepare_unembed_params(w_u)

    logits = unembed_forward(x, w_u_prepped, d_vocab=d_vocab)
    logits = jax.block_until_ready(logits)

    # Reference at the kernel's compute precision (bf16 operands, f32 accumulate).
    ref_bf16 = jnp.dot(x.astype(jnp.bfloat16), w_u.astype(jnp.bfloat16),
                       preferred_element_type=jnp.float32)
    np.testing.assert_allclose(np.asarray(logits), np.asarray(ref_bf16),
                               rtol=1e-3, atol=1e-3)

    # Loose check against the exact f32 PyTorch semantics (bf16 weight stream).
    ref_f32 = x @ w_u
    np.testing.assert_allclose(np.asarray(logits), np.asarray(ref_f32),
                               rtol=2e-2, atol=2e-2)

    assert logits.shape == (BATCH, SEQ, D_VOCAB)
    print("KERNEL_OK")
</pallas_src>

<mosaic_0001>
module attributes {stable_mosaic.version = 11 : i64} {
  func.func @unembed_kernel(%arg0: i32, %arg1: i32, %arg2: memref<8x32xbf16, #tpu.memory_space<vmem>>, %arg3: memref<32x128xbf16, #tpu.memory_space<vmem>>, %arg4: memref<8x128xf32, #tpu.memory_space<vmem>>) attributes {dimension_semantics = [#tpu.dimension_semantics<parallel>, #tpu.dimension_semantics<parallel>], iteration_bounds = array<i64: 1, 2>, scalar_prefetch = 0 : i64, scratch_operands = 0 : i64, tpu.core_type = #tpu.core_type<tc>, window_params = [{transform_indices = @transform_0, window_bounds = array<i64: 8, 32>}, {transform_indices = @transform_1, window_bounds = array<i64: 32, 128>}, {transform_indices = @transform_2, window_bounds = array<i64: 8, 128>}]} {
    %c0 = arith.constant 0 : index
    %c0_0 = arith.constant 0 : index
    %0 = vector.load %arg2[%c0, %c0_0] : memref<8x32xbf16, #tpu.memory_space<vmem>>, vector<8x32xbf16>
    %c0_1 = arith.constant 0 : index
    %c0_2 = arith.constant 0 : index
    %1 = vector.load %arg3[%c0_1, %c0_2] : memref<32x128xbf16, #tpu.memory_space<vmem>>, vector<32x128xbf16>
    %cst = arith.constant dense<0.000000e+00> : vector<8x128xf32>
    %2 = tpu.matmul %0, %1, %cst {dimension_numbers = #tpu.dot_dimension_numbers<[1], [0], [0], [1], [0, 0, 1, 1], [], []>} : vector<8x32xbf16>, vector<32x128xbf16>, vector<8x128xf32> -> vector<8x128xf32>
    %c0_3 = arith.constant 0 : index
    %c0_4 = arith.constant 0 : index
    %3 = vector.load %arg4[%c0_3, %c0_4] : memref<8x128xf32, #tpu.memory_space<vmem>>, vector<8x128xf32>
    tpu.vector_store %arg4[%c0_3, %c0_4], %2 {strides = array<i32>} : memref<8x128xf32, #tpu.memory_space<vmem>>, vector<8x128xf32>,
    return
  }
  func.func @transform_0(%arg0: i32, %arg1: i32) -> (i32, i32) {
    %c0_i32 = arith.constant 0 : i32
    %c0_i32_0 = arith.constant 0 : i32
    return %arg1, %c0_i32 : i32, i32
  }
  func.func @transform_1(%arg0: i32, %arg1: i32) -> (i32, i32) {
    %c0_i32 = arith.constant 0 : i32
    %c0_i32_0 = arith.constant 0 : i32
    return %c0_i32, %arg0 : i32, i32
  }
  func.func @transform_2(%arg0: i32, %arg1: i32) -> (i32, i32) {
    %c0_i32 = arith.constant 0 : i32
    return %arg1, %arg0 : i32, i32
  }
}

</mosaic_0001>

<llo_original>
// kernel: unembed_forward.1
$region0: #{unembed_forward.1}
  #allocation0 [shape = 'u32[]', space=smem, size = 0x4, offset = 0x4, fixed_abs, tag = 'smem constant byte address 0x4 - core index']
  #allocation1 [shape = 'u32[144,128]{1,0:T(1,128)}', space=vmem, size = 0x12000, scoped, tag = 'internal scratch']
  %s0 = inlined_call_operand.vmem [shape: bf16[16,32], index: 0, kind: input, shape index: {}]
  %s1 = inlined_call_operand.vmem [shape: bf16[32,128], index: 1, kind: input, shape index: {}]
  %s2 = inlined_call_operand.vmem [shape: f32[16,128], index: 2, kind: output, shape index: {}]
  %s3 = sld [smem:[#allocation0]]
  $region41: #{unembed_forward.1} parent=0
    _
  %s5 = ssub.s32 1, %s3
  %s6 = scalar_select 0, %s5, %s3
  loop: start=0, step=1, limit=4
  $region2: #{unembed_forward.1} parent=0 // loop_pre_header
    _
  $region3: #{unembed_forward.1} parent=0 // loop_header
    %s8 = sphi 0, %s12
    %p9 = scmp.ge.s32.totalorder %s8, 4
    %s15 = sphi 0, %s27
    %s16 = sphi 0, %s23
    %s17 = sphi 0, %s15
    %s18 = sphi 0, %s16
    %s19 = sphi 0, %s17
    %s20 = sphi 0, %s18
    %s30 = sphi 0, %s32
    %s33 = sphi 0, %s30
    %s34 = sphi 0, %s33
    %s50 = sphi 0, %s34
    %s56 = sphi 0, %s58
    %s59 = sphi 0, %s56
    %s60 = sphi 0, %s59
    %s76 = sphi 0, %s60
    %s84 = sphi 0, %s86
    %s87 = sphi 0, %s84
    %s88 = sphi 0, %s87
    %s104 = sphi 0, %s88
  $region4: #{unembed_forward.1} parent=0 // loop_header_branch
    %11 = sbr.rel (%p9) target = $region8
  $region5: #{unembed_forward.1} parent=0 // loop_body
    %s13 = ssub.s32 %s8, 1
    %s14 = ssub.s32 %s8, 2
    %s21 = sadd.s32 1, %s16
    %p22 = scmp.ge.s32.totalorder %s21, 2
    %s23 = scalar_select %p22, 0, %s21
    %s24 = sadd.s32 1, %s15
    %s25 = scalar_select %p22, %s24, %s15
    %p26 = scmp.ge.s32.totalorder %s25, 1
    %s27 = scalar_select %p26, 0, %s25
    %s28 = ssub.s32 %s16, %s23
    %p29 = scmp.eq.s32.totalorder %s28, 0
    %s31 = sadd.s32 %s30, 1
    %s32 = scalar_select %p29, %s30, %s31
    %p35 = pneg %p29
    %p36 = scmp.eq.s32.totalorder %s8, 1
    %p37 = por %p35, %p36
    %p38 = scmp.ne.s32.totalorder %s30, %s33
    %p39 = scmp.eq.s32.totalorder %s8, 0
    %p40 = por %p38, %p39
    %p41 = scmp.ne.s32.totalorder %s30, %s33
    %p42 = scmp.eq.s32.totalorder %s13, 1
    %p43 = por %p41, %p42
    %p44 = scmp.ne.s32.totalorder %s33, %s34
    %p45 = scmp.eq.s32.totalorder %s13, 0
    %p46 = por %p44, %p45
    %p47 = scmp.ne.s32.totalorder %s33, %s34
    %p48 = scmp.eq.s32.totalorder %s14, 1
    %p49 = por %p47, %p48
    %p51 = scmp.ne.s32.totalorder %s34, %s50
    %p52 = scmp.eq.s32.totalorder %s14, 0
    %p53 = por %p51, %p52
    %s54 = ssub.s32 %s15, %s27
    %p55 = scmp.eq.s32.totalorder %s54, 0
    %s57 = sadd.s32 %s56, 1
    %s58 = scalar_select %p55, %s56, %s57
    %p61 = pneg %p55
    %p62 = scmp.eq.s32.totalorder %s8, 1
    %p63 = por %p61, %p62
    %p64 = scmp.ne.s32.totalorder %s56, %s59
    %p65 = scmp.eq.s32.totalorder %s8, 0
    %p66 = por %p64, %p65
    %p67 = scmp.ne.s32.totalorder %s56, %s59
    %p68 = scmp.eq.s32.totalorder %s13, 1
    %p69 = por %p67, %p68
    %p70 = scmp.ne.s32.totalorder %s59, %s60
    %p71 = scmp.eq.s32.totalorder %s13, 0
    %p72 = por %p70, %p71
    %p73 = scmp.ne.s32.totalorder %s59, %s60
    %p74 = scmp.eq.s32.totalorder %s14, 1
    %p75 = por %p73, %p74
    %p77 = scmp.ne.s32.totalorder %s60, %s76
    %p78 = scmp.eq.s32.totalorder %s14, 0
    %p79 = por %p77, %p78
    %s80 = ssub.s32 %s16, %s23
    %s81 = ssub.s32 %s15, %s27
    %s82 = sor.u32 %s80, %s81
    %p83 = scmp.eq.s32.totalorder %s82, 0
    %s85 = sadd.s32 %s84, 1
    %s86 = scalar_select %p83, %s84, %s85
    %p89 = pneg %p83
    %p90 = scmp.eq.s32.totalorder %s8, 1
    %p91 = por %p89, %p90
    %p92 = scmp.ne.s32.totalorder %s84, %s87
    %p93 = scmp.eq.s32.totalorder %s8, 0
    %p94 = por %p92, %p93
    %p95 = scmp.ne.s32.totalorder %s84, %s87
    %p96 = scmp.eq.s32.totalorder %s13, 1
    %p97 = por %p95, %p96
    %p98 = scmp.ne.s32.totalorder %s87, %s88
    %p99 = scmp.eq.s32.totalorder %s13, 0
    %p100 = por %p98, %p99
    %p101 = scmp.ne.s32.totalorder %s87, %s88
    %p102 = scmp.eq.s32.totalorder %s14, 1
    %p103 = por %p101, %p102
    %p105 = scmp.ne.s32.totalorder %s88, %s104
    %p106 = scmp.eq.s32.totalorder %s14, 0
    %p107 = por %p105, %p106
    %p108 = scmp.le.s32.totalorder 1, %s8
    %p109 = scmp.lt.s32.totalorder %s8, 3
    %p110 = pnand %p108, %p109
    %p111 = pneg %p110
    // Predicated region
    $region9: #{unembed_forward.1} parent=5 // pred_check
      _
    $region10: #{unembed_forward.1} parent=5 // pred_check_branch
      %113 = sbr.rel (%p110) target = $region12
    $region11: #{unembed_forward.1} parent=5 // pred_region
      %s114 = ssub.s32 %s8, 1
      // Predicated region
      $region13: #{unembed_forward.1} parent=11 // pred_check
        %p115 = pneg %p72
      $region14: #{unembed_forward.1} parent=11 // pred_check_branch
        %117 = sbr.rel (%p115) target = $region16
      $region15: #{unembed_forward.1} parent=11 // pred_region
        %p118 = scmp.lt.s32.totalorder %s17, 0
        %s119 = scalar_select %p118, %s17, 0
        %s120 = smul.addr %s119, 4
        %s121 = scalar_lea.vmem %s1, %s120
      $region16: #{unembed_forward.1} parent=11 // pred_fallthru
        _
    $region12: #{unembed_forward.1} parent=5 // pred_fallthru
      _
    %p122 = scmp.lt.s32.totalorder %s8, 2
    // Predicated region
    $region17: #{unembed_forward.1} parent=5 // pred_check
      %p123 = pneg %p122
    $region18: #{unembed_forward.1} parent=5 // pred_check_branch
      %125 = sbr.rel (%p123) target = $region20
    $region19: #{unembed_forward.1} parent=5 // pred_region
      // Predicated region
      $region21: #{unembed_forward.1} parent=19 // pred_check
        %p126 = pneg %p40
      $region22: #{unembed_forward.1} parent=19 // pred_check_branch
        %128 = sbr.rel (%p126) target = $region24
      $region23: #{unembed_forward.1} parent=19 // pred_region
        %p129 = scmp.lt.s32.totalorder %s16, 1
        %s130 = scalar_select %p129, %s16, 1
        %s131 = smul.addr %s130, 4
        %s132 = scalar_lea.vmem %s0, %s131
      $region24: #{unembed_forward.1} parent=19 // pred_fallthru
        _
    $region20: #{unembed_forward.1} parent=5 // pred_fallthru
      _
    %p133 = scmp.le.s32.totalorder 1, %s8
    %p134 = scmp.lt.s32.totalorder %s8, 3
    %p135 = pnand %p133, %p134
    %p136 = pneg %p135
    // Predicated region
    $region25: #{unembed_forward.1} parent=5 // pred_check
      _
    $region26: #{unembed_forward.1} parent=5 // pred_check_branch
      %138 = sbr.rel (%p135) target = $region28
    $region27: #{unembed_forward.1} parent=5 // pred_region
      %s139 = ssub.s32 %s8, 1
      %p140 = scmp.lt.s32.totalorder %s18, 1
      %s141 = scalar_select %p140, %s18, 1
      %s142 = smul.addr %s141, 4
      %s143 = scalar_lea.vmem %s0, %s142
      %p144 = pneg %p46
      %p145 = pneg %p43
      %p146 = scmp.lt.s32.totalorder %s17, 0
      %s147 = scalar_select %p146, %s17, 0
      %s148 = smul.addr %s147, 4
      %s149 = scalar_lea.vmem %s1, %s148
      %p150 = pneg %p72
      %p151 = pneg %p69
      %p152 = pneg %p100
      %p153 = pneg %p97
      %p154 = scmp.lt.s32.totalorder %s18, 1
      %s155 = scalar_select %p154, %s18, 1
      %p156 = scmp.lt.s32.totalorder %s17, 0
      %s157 = scalar_select %p156, %s17, 0
      %s158 = sadd.s32 %s157, %s155
      %s159 = smul.addr %s158, 8
      %s160 = scalar_lea.vmem %s2, %s159
      %p161 = scmp.lt.s32.totalorder %s18, 1
      %s162 = scalar_select %p161, %s18, 1
      %s163 = smul.addr %s162, 4
      %s164 = scalar_lea.vmem %s0, %s163
      %p165 = scmp.lt.s32.totalorder %s17, 0
      %s166 = scalar_select %p165, %s17, 0
      %s167 = smul.addr %s166, 4
      %s168 = scalar_lea.vmem %s1, %s167
      %p169 = scmp.lt.s32.totalorder %s18, 1
      %s170 = scalar_select %p169, %s18, 1
      %p171 = scmp.lt.s32.totalorder %s17, 0
      %s172 = scalar_select %p171, %s17, 0
      %s173 = sadd.s32 %s172, %s170
      %s174 = smul.addr %s173, 8
      %s175 = scalar_lea.vmem %s2, %s174
      %v177 = vld [vmem:[%s164] sm:$0xf]
      %v178 = vld [vmem:[%s168] sm:$0xf]
      %v179 = vld [vmem:[%s168 + $0x4] sm:$0xf]
      %v180 = vld [vmem:[%s168 + $0x8] sm:$0xf]
      %v181 = vld [vmem:[%s168 + $0xc] sm:$0xf]
      %v186 = vunpack.c.l.b16 %v178
      %v187 = vunpack.c.l.b16 %v179
      %v188 = vunpack.c.l.b16 %v180
      %v189 = vunpack.c.l.b16 %v181
      %v190 = vpack.c.b16 %v187, %v186
      %v191 = vpack.c.b16 %v189, %v188
      %vm194 = vcmask 261120
      %v196 = vsel %vm194, %v177, 0
      %198 = vmatprep.subr.bf16.mxu0 0
      %199 = vmatpush1.bf16.msra.mxu0 0
      %200 = vmatprep.subr.bf16.mxu0 0
      %201 = vmatpush1.bf16.msra.mxu0 0
      %202 = vmatprep.subr.bf16.mxu0 0
      %203 = vmatpush1.bf16.msra.mxu0 0
      %204 = vmatprep.subr.bf16.mxu0 0
      %205 = vmatpush1.bf16.msra.mxu0 0
      %206 = vmatprep.subr.bf16.mxu0 0
      %207 = vmatpush1.bf16.msra.mxu0 0
      %208 = vmatprep.subr.bf16.mxu0 0
      %209 = vmatpush1.bf16.msra.mxu0 0
      %210 = vmatprep.subr.bf16.mxu0 0
      %211 = vmatpush1.bf16.msra.mxu0 %v191
      %212 = vmatprep.subr.bf16.mxu0 0
      %213 = vmatpush1.bf16.msra.mxu0 %v190
      %214 = vmatprep.subr.bf16.mxu0 0
      %215 = vmatpush2.bf16.msra.mxu0 0
      %216 = vmatprep.subr.bf16.mxu0 0
      %217 = vmatpush2.bf16.msra.mxu0 0
      %218 = vmatprep.subr.bf16.mxu0 0
      %219 = vmatpush2.bf16.msra.mxu0 0
      %220 = vmatprep.subr.bf16.mxu0 0
      %221 = vmatpush2.bf16.msra.mxu0 0
      %222 = vmatprep.subr.bf16.mxu0 0
      %223 = vmatpush2.bf16.msra.mxu0 0
      %224 = vmatprep.subr.bf16.mxu0 0
      %225 = vmatpush2.bf16.msra.mxu0 0
      %226 = vmatprep.subr.bf16.mxu0 0
      %227 = vmatpush2.bf16.msra.mxu0 0
      %228 = vmatprep.subr.bf16.mxu0 0
      %229 = vmatpush2.bf16.msra.mxu0 0
      %230 = vmatprep.mubr.bf16.mxu0 0
      %231 = vmatmul.mubr.bf16.gmra.mxu0 %v196
      %v232 = vpop.f32.mrf.mxu0
      %v233 = vadd.f32 0.0, %v232
      %v234 = vpop.f32.mrf.mxu0
      %v235 = vpop.f32.mrf.mxu0
      %v236 = vpop.f32.mrf.mxu0
      %237 = vdwg.mxu0
      %238 = vst [vmem:[%s175] sm:$0xff] %v233
      %p239 = scmp.lt.s32.totalorder %s18, 1
      %s240 = scalar_select %p239, %s18, 1
      %p241 = scmp.lt.s32.totalorder %s17, 0
      %s242 = scalar_select %p241, %s17, 0
      %s243 = sadd.s32 %s242, %s240
      %s244 = smul.addr %s243, 8
      %s245 = scalar_lea.vmem %s2, %s244
      // Predicated region
      $region29: #{unembed_forward.1} parent=27 // pred_check
        %p246 = pneg %p97
      $region30: #{unembed_forward.1} parent=27 // pred_check_branch
        %248 = sbr.rel (%p246) target = $region32
      $region31: #{unembed_forward.1} parent=27 // pred_region
        _
      $region32: #{unembed_forward.1} parent=27 // pred_fallthru
        _
    $region28: #{unembed_forward.1} parent=5 // pred_fallthru
      _
    %p249 = scmp.le.s32.totalorder 2, %s8
    // Predicated region
    $region33: #{unembed_forward.1} parent=5 // pred_check
      %p250 = pneg %p249
    $region34: #{unembed_forward.1} parent=5 // pred_check_branch
      %252 = sbr.rel (%p250) target = $region36
    $region35: #{unembed_forward.1} parent=5 // pred_region
      %s253 = ssub.s32 %s8, 2
      // Predicated region
      $region37: #{unembed_forward.1} parent=35 // pred_check
        %p254 = pneg %p103
      $region38: #{unembed_forward.1} parent=35 // pred_check_branch
        %256 = sbr.rel (%p254) target = $region40
      $region39: #{unembed_forward.1} parent=35 // pred_region
        %p257 = scmp.lt.s32.totalorder %s20, 1
        %s258 = scalar_select %p257, %s20, 1
        %p259 = scmp.lt.s32.totalorder %s19, 0
        %s260 = scalar_select %p259, %s19, 0
        %s261 = sadd.s32 %s260, %s258
        %s262 = smul.addr %s261, 8
        %s263 = scalar_lea.vmem %s2, %s262
      $region40: #{unembed_forward.1} parent=35 // pred_fallthru
        _
    $region36: #{unembed_forward.1} parent=5 // pred_fallthru
      _
  $region6: #{unembed_forward.1} parent=0 // loop_footer
    %s12 = sadd.s32 1, %s8
  $region7: #{unembed_forward.1} parent=0 // loop_footer_branch
    %7 = sbr.rel target = $region3
  $region8: #{unembed_forward.1} parent=0 // loop_exit
    _

</llo_original>
